<compile_context>
chip_gen: v7x
topology: tpu7x:2x2x1
jax: 0.10.0
libtpu: 0.0.40
codegen_flags: <defaults>
</compile_context>

<pallas_src>
import math
from functools import partial

import numpy as np

import jax
import jax.numpy as jnp
from jax.experimental import pallas as pl
from jax.experimental.pallas import tpu as pltpu


# ----------------------------------------------------------------------------
# Pallas kernel: pairwise IoU (equivalent to mmdet bbox_overlaps(mode='iou')).
# One (TN, TM) output tile per grid step; areas are precomputed inputs.
# ----------------------------------------------------------------------------
def _iou_kernel(b1_ref, a1_ref, b2t_ref, a2_ref, out_ref):
    b1 = b1_ref[...]        # (TN, 4)  [x1, y1, x2, y2]
    b2t = b2t_ref[...]      # (4, TM)  transposed boxes
    x1a, y1a, x2a, y2a = b1[:, 0:1], b1[:, 1:2], b1[:, 2:3], b1[:, 3:4]   # (TN,1)
    x1b, y1b, x2b, y2b = b2t[0:1, :], b2t[1:2, :], b2t[2:3, :], b2t[3:4, :]  # (1,TM)

    w = jnp.maximum(jnp.minimum(x2a, x2b) - jnp.maximum(x1a, x1b), 0.0)
    h = jnp.maximum(jnp.minimum(y2a, y2b) - jnp.maximum(y1a, y1b), 0.0)
    inter = w * h                                        # (TN, TM)

    union = jnp.maximum(a1_ref[...] + a2_ref[...] - inter, 1e-6)
    # EUP reciprocal (separate VLIW slot) + one VPU multiply instead of a divide.
    out_ref[...] = inter * pl.reciprocal(union, approx=True)


_TN_MAX = 512      # rows per tile   (sublane axis)
_TM_MAX = 2048     # cols per tile   (lane axis, multiple of 128)


def _round_up(x, m):
    return ((x + m - 1) // m) * m


@partial(jax.jit, static_argnums=(2, 3, 4, 5))
def _iou_padded(b1, b2, n_pad, m_pad, tn, tm):
    """Padded, tiled pairwise IoU.  b1: (n,4), b2: (m,4) -> (n, m) f32."""
    n, m = b1.shape[0], b2.shape[0]
    b1p = jnp.zeros((n_pad, 4), jnp.float32).at[:n].set(b1)
    b2p = jnp.zeros((m_pad, 4), jnp.float32).at[:m].set(b2)

    # Hoisted, j/i-only work: areas computed once in XLA (fuses with padding).
    area1 = ((b1p[:, 2] - b1p[:, 0]) * (b1p[:, 3] - b1p[:, 1]))[:, None]   # (n_pad, 1)
    b2t = b2p.T                                                            # (4, m_pad)
    area2 = ((b2t[2] - b2t[0]) * (b2t[3] - b2t[1]))[None, :]               # (1, m_pad)

    out = pl.pallas_call(
        _iou_kernel,
        out_shape=jax.ShapeDtypeStruct((n_pad, m_pad), jnp.float32),
        grid_spec=pltpu.PrefetchScalarGridSpec(
            num_scalar_prefetch=0,
            grid=(n_pad // tn, m_pad // tm),
            in_specs=[
                pl.BlockSpec((tn, 4), lambda i, j: (i, 0)),   # boxes1 row-tile
                pl.BlockSpec((tn, 1), lambda i, j: (i, 0)),   # area1 row-tile
                pl.BlockSpec((4, tm), lambda i, j: (0, j)),   # boxes2^T col-tile
                pl.BlockSpec((1, tm), lambda i, j: (0, j)),   # area2 col-tile
            ],
            out_specs=pl.BlockSpec((tn, tm), lambda i, j: (i, j)),
        ),
        compiler_params=pltpu.CompilerParams(
            dimension_semantics=("parallel", "parallel"),   # megacore on v7x
            vmem_limit_bytes=32 * 1024 * 1024,              # safe on v5e/v6e/v7x
        ),
    )(b1p, area1, b2t, area2)
    return out[:n, :m]


def pairwise_iou(boxes1, boxes2):
    """boxes1: (N,4), boxes2: (M,4) -> IoU matrix (N, M), float32 (device array)."""
    b1 = jnp.asarray(np.asarray(boxes1, dtype=np.float32).reshape(-1, 4)[:, :4])
    b2 = jnp.asarray(np.asarray(boxes2, dtype=np.float32).reshape(-1, 4)[:, :4])
    n, m = int(b1.shape[0]), int(b2.shape[0])
    tn = min(_TN_MAX, _round_up(max(n, 1), 8))
    tm = min(_TM_MAX, _round_up(max(m, 1), 128))
    n_pad = _round_up(max(n, 1), tn)
    m_pad = _round_up(max(m, 1), tm)
    return _iou_padded(b1, b2, n_pad, m_pad, tn, tm)


# ----------------------------------------------------------------------------
# Sequential NMS-loss bookkeeping (mirrors the eager PyTorch reference).
# TODO(synk): the data-dependent while-loop / dict bookkeeping has no clean
#             Pallas equivalent; it runs in host Python over the Pallas IoU output.
# ----------------------------------------------------------------------------
def single_nms_loss(gt_inds, anchor_gt_inds, gt_box, proposals, nms_thr, add_gt,
                    push_select, fix_pull_reg, push_relax, thr_push_relax):
    eps = 1e-6

    # One batched D2H transfer for all raw per-image inputs.
    gt_box, proposals, gt_inds = jax.device_get((gt_box, proposals, anchor_gt_inds))
    gt_box = np.asarray(gt_box, dtype=np.float32).reshape(-1, 4)
    proposals = np.asarray(proposals, dtype=np.float32)
    gt_inds = np.asarray(gt_inds)                     # reference overwrites gt_inds
    tmp_zero = float(np.mean(proposals)) * 0.0

    pos_mask = gt_inds >= 0
    if int(np.sum(pos_mask)) <= 1:
        return {"nms_push_loss": tmp_zero, "nms_pull_loss": tmp_zero}
    gt_inds = gt_inds[pos_mask]
    proposals = proposals[pos_mask]

    if add_gt:
        gt_num = gt_box.shape[0]
        gt_score = np.ones((gt_num, 1), dtype=np.float32)
        gt_proposals = np.concatenate([gt_box, gt_score], axis=1)
        proposals = np.concatenate([proposals, gt_proposals], axis=0)
        gt_inds = np.concatenate([gt_inds, np.arange(gt_num)], axis=0)

    scores = proposals[:, 4]
    # NOTE: torch.sort is not guaranteed stable; ties may order differently.
    idx = np.argsort(scores, kind="stable")           # ascending, like torch.sort(0)

    # --- single fused Pallas launch + single D2H transfer per image ---------
    # rows = [gt boxes ; proposal boxes], cols = proposal boxes.
    # push_select only affects gradient flow (detach) in torch; forward values
    # are identical, so one IoU matrix covers both branches.
    G = gt_box.shape[0]
    prop_boxes = proposals[:, :4]
    boxes1 = np.concatenate([gt_box, prop_boxes], axis=0) if G > 0 else prop_boxes
    combined = np.asarray(pairwise_iou(boxes1, prop_boxes))   # (G+P, P), one D2H
    gt_proposal_iou = combined[:G]                            # (G, P)
    iou = combined[G:]                                        # (P, P)

    max_score_box_rec = {}
    total_pull_loss = 0.0
    total_push_loss = 0.0
    pull_cnt = 0
    push_cnt = 0

    while idx.size > 0:
        i = int(idx[-1])
        idx = idx[:-1]
        i_gt = int(gt_inds[i])

        if i_gt in max_score_box_rec:
            max_score_idx = max_score_box_rec[i_gt]
            max_s_iou = max(float(iou[max_score_idx, i]), eps)
            pull_loss = -math.log(1.0 - nms_thr + max_s_iou)
            # fix_pull_reg only detaches in torch; forward value unchanged.
            pull_loss = pull_loss * float(proposals[i, 4])
            pull_cnt += 1
        else:
            max_score_box_rec[i_gt] = i
            pull_loss = tmp_zero

        if idx.size == 0:
            break

        cur_iou = iou[i, idx]
        overlap_mask = cur_iou > nms_thr
        overlap_idx_idx = idx[overlap_mask]
        cur_gt_inds_sel = gt_inds[overlap_idx_idx]
        push_mask = cur_gt_inds_sel != i_gt

        if int(np.sum(push_mask)) != 0:
            push_loss = 0.0
            tmp_push_cnt = eps
            for s_idx in overlap_idx_idx:
                s_idx = int(s_idx)
                s_gt = int(gt_inds[s_idx])
                if s_gt != i_gt and s_gt not in max_score_box_rec:
                    if thr_push_relax:
                        tmp_gt_iou = float(gt_proposal_iou[s_gt, s_idx])
                        if tmp_gt_iou < nms_thr:
                            tmp_push_loss = (nms_thr - tmp_gt_iou) * float(scores[s_idx])
                        else:
                            tmp_push_loss = -math.log(tmp_gt_iou) * float(scores[s_idx])
                    elif push_relax:
                        gap = min(1.0 - nms_thr + float(gt_proposal_iou[s_gt, s_idx]), 1.0)
                        tmp_push_loss = (-math.log(gap) - math.log(float(scores[s_idx]))) \
                                        * float(scores[s_idx])
                    else:
                        tmp_push_loss = -math.log(eps + float(gt_proposal_iou[s_gt, s_idx])) \
                                        * float(scores[s_idx])
                    tmp_push_cnt += 1
                    push_loss = push_loss + tmp_push_loss
            push_loss = push_loss / tmp_push_cnt
            push_cnt += 1
        else:
            push_loss = tmp_zero

        total_pull_loss = total_pull_loss + pull_loss
        total_push_loss = total_push_loss + push_loss
        idx = idx[~overlap_mask]

    pull = total_pull_loss / (pull_cnt + eps)
    push = total_push_loss / (push_cnt + eps)
    return {"nms_push_loss": push, "nms_pull_loss": pull}


def nms_loss2(gt_inds, anchor_gt_inds, gt_bboxes, proposal_list, pull_weight,
              push_weight, nms_thr, add_gt, push_select, fix_pull_reg,
              push_relax, thr_push_relax):
    assert len(gt_inds) > 0
    img_num = len(gt_inds)
    push_loss = 0.0
    pull_loss = 0.0
    for img_gt_inds, img_anchor_gt_inds, img_gt_bboxes, img_proposals in zip(
            gt_inds, anchor_gt_inds, gt_bboxes, proposal_list):
        single_img_loss = single_nms_loss(
            img_gt_inds, img_anchor_gt_inds, img_gt_bboxes, img_proposals,
            nms_thr, add_gt, push_select, fix_pull_reg, push_relax, thr_push_relax)
        push_loss = push_loss + single_img_loss["nms_push_loss"]
        pull_loss = pull_loss + single_img_loss["nms_pull_loss"]
    push_loss = push_loss / img_num
    pull_loss = pull_loss / img_num
    return {"nms_push_loss": jnp.float32(push_loss * push_weight),
            "nms_pull_loss": jnp.float32(pull_loss * pull_weight)}


class NMSLoss2:
    """JAX/Pallas port of mmdet NMSLoss2 (forward only)."""

    def __init__(self, reduction="none", loss_weight=1.0, add_gt=False,
                 push_select=True, fix_pull_reg=False, push_relax=False,
                 thr_push_relax=False, pull_weight=1, push_weight=1, nms_thr=0.5):
        self.reduction = reduction
        self.loss_weight = loss_weight
        self.pull_weight = pull_weight
        self.push_weight = push_weight
        self.nms_thr = nms_thr
        self.add_gt = add_gt
        self.push_select = push_select
        self.fix_pull_reg = fix_pull_reg
        self.push_relax = push_relax
        self.thr_push_relax = thr_push_relax

    def forward(self, gt_inds, anchor_gt_inds, gt_bboxes, proposal_list,
                weight=None, avg_factor=None, reduction_override=None, **kwargs):
        assert weight is None or weight == 1, "please use pull/push_weight instead"
        return nms_loss2(gt_inds, anchor_gt_inds, gt_bboxes, proposal_list,
                         self.pull_weight, self.push_weight, self.nms_thr,
                         self.add_gt, self.push_select, self.fix_pull_reg,
                         self.push_relax, self.thr_push_relax, **kwargs)

    __call__ = forward


# ----------------------------------------------------------------------------
# Demo / smoke test
# ----------------------------------------------------------------------------
def _make_boxes(key, n, lo=0.0, hi=50.0, wmin=5.0, wmax=30.0):
    k1, k2 = jax.random.split(key)
    xy = jax.random.uniform(k1, (n, 2), minval=lo, maxval=hi)
    wh = jax.random.uniform(k2, (n, 2), minval=wmin, maxval=wmax)
    return jnp.concatenate([xy, xy + wh], axis=1)


if __name__ == "__main__":
    key = jax.random.PRNGKey(0)
    img_num = 2
    num_gt = 3
    num_anchors = 16

    gt_inds_list, anchor_gt_inds_list, gt_bboxes_list, proposal_list = [], [], [], []
    for img in range(img_num):
        key, kb, kp, ks, ki = jax.random.split(key, 5)
        gt_boxes = _make_boxes(kb, num_gt)
        prop_boxes = _make_boxes(kp, num_anchors)
        scores = jax.random.uniform(ks, (num_anchors, 1), minval=0.05, maxval=1.0)
        proposals = jnp.concatenate([prop_boxes, scores], axis=1)        # (A, 5)
        a_gt_inds = jax.random.randint(ki, (num_anchors,), -1, num_gt)   # (A,)

        gt_bboxes_list.append(gt_boxes)
        proposal_list.append(proposals)
        anchor_gt_inds_list.append(a_gt_inds)
        gt_inds_list.append(a_gt_inds)  # reference overwrites gt_inds with anchor_gt_inds

    loss_mod = NMSLoss2(nms_thr=0.5, pull_weight=1.0, push_weight=1.0)
    out = loss_mod(gt_inds_list, anchor_gt_inds_list, gt_bboxes_list, proposal_list)

    jax.block_until_ready(out["nms_push_loss"])
    jax.block_until_ready(out["nms_pull_loss"])
    assert np.isfinite(float(out["nms_push_loss"]))
    assert np.isfinite(float(out["nms_pull_loss"]))
    print("KERNEL_OK")
</pallas_src>

<mosaic_0001>
module attributes {stable_mosaic.version = 11 : i64} {
  func.func @_iou_kernel(%arg0: i32, %arg1: i32, %arg2: memref<16x4xf32, #tpu.memory_space<vmem>>, %arg3: memref<16x1xf32, #tpu.memory_space<vmem>>, %arg4: memref<4x128xf32, #tpu.memory_space<vmem>>, %arg5: memref<1x128xf32, #tpu.memory_space<vmem>>, %arg6: memref<16x128xf32, #tpu.memory_space<vmem>>) attributes {dimension_semantics = [#tpu.dimension_semantics<parallel>, #tpu.dimension_semantics<parallel>], iteration_bounds = array<i64: 1, 1>, scalar_prefetch = 0 : i64, scratch_operands = 0 : i64, tpu.core_type = #tpu.core_type<tc>, window_params = [{transform_indices = @transform_0, window_bounds = array<i64: 16, 4>}, {transform_indices = @transform_1, window_bounds = array<i64: 16, 1>}, {transform_indices = @transform_2, window_bounds = array<i64: 4, 128>}, {transform_indices = @transform_3, window_bounds = array<i64: 1, 128>}, {transform_indices = @transform_4, window_bounds = array<i64: 16, 128>}]} {
    %c0 = arith.constant 0 : index
    %c0_0 = arith.constant 0 : index
    %0 = vector.load %arg2[%c0, %c0_0] : memref<16x4xf32, #tpu.memory_space<vmem>>, vector<16x4xf32>
    %c0_1 = arith.constant 0 : index
    %c0_2 = arith.constant 0 : index
    %1 = vector.load %arg4[%c0_1, %c0_2] : memref<4x128xf32, #tpu.memory_space<vmem>>, vector<4x128xf32>
    %2 = vector.extract_strided_slice %0 {offsets = [0, 0], sizes = [16, 1], strides = [1, 1]} : vector<16x4xf32> to vector<16x1xf32>
    %3 = vector.extract_strided_slice %0 {offsets = [0, 1], sizes = [16, 1], strides = [1, 1]} : vector<16x4xf32> to vector<16x1xf32>
    %4 = vector.extract_strided_slice %0 {offsets = [0, 2], sizes = [16, 1], strides = [1, 1]} : vector<16x4xf32> to vector<16x1xf32>
    %5 = vector.extract_strided_slice %0 {offsets = [0, 3], sizes = [16, 1], strides = [1, 1]} : vector<16x4xf32> to vector<16x1xf32>
    %6 = vector.extract_strided_slice %1 {offsets = [0, 0], sizes = [1, 128], strides = [1, 1]} : vector<4x128xf32> to vector<1x128xf32>
    %7 = vector.extract_strided_slice %1 {offsets = [1, 0], sizes = [1, 128], strides = [1, 1]} : vector<4x128xf32> to vector<1x128xf32>
    %8 = vector.extract_strided_slice %1 {offsets = [2, 0], sizes = [1, 128], strides = [1, 1]} : vector<4x128xf32> to vector<1x128xf32>
    %9 = vector.extract_strided_slice %1 {offsets = [3, 0], sizes = [1, 128], strides = [1, 1]} : vector<4x128xf32> to vector<1x128xf32>
    %10 = vector.broadcast %4 : vector<16x1xf32> to vector<16x128xf32>
    %11 = vector.broadcast %8 : vector<1x128xf32> to vector<16x128xf32>
    %12 = arith.minimumf %10, %11 : vector<16x128xf32>
    %13 = vector.broadcast %2 : vector<16x1xf32> to vector<16x128xf32>
    %14 = vector.broadcast %6 : vector<1x128xf32> to vector<16x128xf32>
    %15 = arith.maximumf %13, %14 : vector<16x128xf32>
    %16 = arith.subf %12, %15 : vector<16x128xf32>
    %cst = arith.constant 0.000000e+00 : f32
    %17 = vector.broadcast %cst : f32 to vector<16x128xf32>
    %18 = arith.maximumf %16, %17 : vector<16x128xf32>
    %19 = vector.broadcast %5 : vector<16x1xf32> to vector<16x128xf32>
    %20 = vector.broadcast %9 : vector<1x128xf32> to vector<16x128xf32>
    %21 = arith.minimumf %19, %20 : vector<16x128xf32>
    %22 = vector.broadcast %3 : vector<16x1xf32> to vector<16x128xf32>
    %23 = vector.broadcast %7 : vector<1x128xf32> to vector<16x128xf32>
    %24 = arith.maximumf %22, %23 : vector<16x128xf32>
    %25 = arith.subf %21, %24 : vector<16x128xf32>
    %cst_3 = arith.constant 0.000000e+00 : f32
    %26 = vector.broadcast %cst_3 : f32 to vector<16x128xf32>
    %27 = arith.maximumf %25, %26 : vector<16x128xf32>
    %28 = arith.mulf %18, %27 : vector<16x128xf32>
    %c0_4 = arith.constant 0 : index
    %c0_5 = arith.constant 0 : index
    %29 = vector.load %arg3[%c0_4, %c0_5] : memref<16x1xf32, #tpu.memory_space<vmem>>, vector<16x1xf32>
    %c0_6 = arith.constant 0 : index
    %c0_7 = arith.constant 0 : index
    %30 = vector.load %arg5[%c0_6, %c0_7] : memref<1x128xf32, #tpu.memory_space<vmem>>, vector<1x128xf32>
    %31 = vector.broadcast %29 : vector<16x1xf32> to vector<16x128xf32>
    %32 = vector.broadcast %30 : vector<1x128xf32> to vector<16x128xf32>
    %33 = arith.addf %31, %32 : vector<16x128xf32>
    %34 = arith.subf %33, %28 : vector<16x128xf32>
    %cst_8 = arith.constant 9.99999997E-7 : f32
    %35 = vector.broadcast %cst_8 : f32 to vector<16x128xf32>
    %36 = arith.maximumf %34, %35 : vector<16x128xf32>
    %37 = tpu.reciprocal %36 {approx = true} : vector<16x128xf32> -> vector<16x128xf32>
    %38 = arith.mulf %28, %37 : vector<16x128xf32>
    %c0_9 = arith.constant 0 : index
    %c0_10 = arith.constant 0 : index
    %39 = vector.load %arg6[%c0_9, %c0_10] : memref<16x128xf32, #tpu.memory_space<vmem>>, vector<16x128xf32>
    tpu.vector_store %arg6[%c0_9, %c0_10], %38 {strides = array<i32>} : memref<16x128xf32, #tpu.memory_space<vmem>>, vector<16x128xf32>,
    return
  }
  func.func @transform_0(%arg0: i32, %arg1: i32) -> (i32, i32) {
    %c0_i32 = arith.constant 0 : i32
    %c0_i32_0 = arith.constant 0 : i32
    return %arg0, %c0_i32 : i32, i32
  }
  func.func @transform_1(%arg0: i32, %arg1: i32) -> (i32, i32) {
    %c0_i32 = arith.constant 0 : i32
    %c0_i32_0 = arith.constant 0 : i32
    return %arg0, %c0_i32 : i32, i32
  }
  func.func @transform_2(%arg0: i32, %arg1: i32) -> (i32, i32) {
    %c0_i32 = arith.constant 0 : i32
    %c0_i32_0 = arith.constant 0 : i32
    return %c0_i32, %arg1 : i32, i32
  }
  func.func @transform_3(%arg0: i32, %arg1: i32) -> (i32, i32) {
    %c0_i32 = arith.constant 0 : i32
    %c0_i32_0 = arith.constant 0 : i32
    return %c0_i32, %arg1 : i32, i32
  }
  func.func @transform_4(%arg0: i32, %arg1: i32) -> (i32, i32) {
    %c0_i32 = arith.constant 0 : i32
    return %arg0, %arg1 : i32, i32
  }
}

</mosaic_0001>

<llo_original>
// kernel: _iou_padded.1
$region0: #{_iou_padded.1}
  #allocation0 [shape = 'u32[]', space=smem, size = 0x4, offset = 0x4, fixed_abs, tag = 'smem constant byte address 0x4 - core index']
  #allocation1 [shape = 'u32[144,128]{1,0:T(1,128)}', space=vmem, size = 0x12000, scoped, tag = 'internal scratch']
  %s0 = inlined_call_operand.vmem [shape: f32[16,4], index: 0, kind: input, shape index: {}]
  %s1 = inlined_call_operand.vmem [shape: f32[16,1], index: 1, kind: input, shape index: {}]
  %s2 = inlined_call_operand.vmem [shape: f32[4,128], index: 2, kind: input, shape index: {}]
  %s3 = inlined_call_operand.vmem [shape: f32[1,128], index: 3, kind: input, shape index: {}]
  %s4 = inlined_call_operand.hbm [shape: f32[16,128], index: 4, kind: output, shape index: {}]
  %s5 = sld [smem:[#allocation0]]
  $region26: #{_iou_padded.1} parent=0
    _
  %s7 = ssub.s32 1, %s5
  %s8 = scalar_select 0, %s7, %s5
  $region1: #{_iou_padded.1} parent=0
    #allocation2 [shape = 'u8[8192]{0}', space=vmem, size = 0x2000, scoped, tag = 'output window, operand 0, single buffered']
    #allocation3 [shape = 's32[1]{0}', space=sflag, size = 0x4, scoped, tag = 'scoped memory for _iou_padded.1']
    %9 = vsyncpa [#allocation3], 0
    // Predicated region
    $region2: #{_iou_padded.1} parent=1 // pred_check
      _
    $region3: #{_iou_padded.1} parent=1 // pred_check_branch
      %11 = sbr.rel (0) target = $region5
    $region4: #{_iou_padded.1} parent=1 // pred_region
      _
    $region5: #{_iou_padded.1} parent=1 // pred_fallthru
      _
    // Predicated region
    $region6: #{_iou_padded.1} parent=1 // pred_check
      _
    $region7: #{_iou_padded.1} parent=1 // pred_check_branch
      %13 = sbr.rel (0) target = $region9
    $region8: #{_iou_padded.1} parent=1 // pred_region
      _
    $region9: #{_iou_padded.1} parent=1 // pred_fallthru
      _
    // Predicated region
    $region10: #{_iou_padded.1} parent=1 // pred_check
      _
    $region11: #{_iou_padded.1} parent=1 // pred_check_branch
      %15 = sbr.rel (0) target = $region13
    $region12: #{_iou_padded.1} parent=1 // pred_region
      _
    $region13: #{_iou_padded.1} parent=1 // pred_fallthru
      _
    // Predicated region
    $region14: #{_iou_padded.1} parent=1 // pred_check
      _
    $region15: #{_iou_padded.1} parent=1 // pred_check_branch
      %17 = sbr.rel (0) target = $region17
    $region16: #{_iou_padded.1} parent=1 // pred_region
      _
    $region17: #{_iou_padded.1} parent=1 // pred_fallthru
      _
    %v18 = vld [vmem:[%s0] sm:$0xff]
    %v19 = vld [vmem:[%s0 + $0x8] sm:$0xff]
    %v20 = vld [vmem:[%s2] sm:$0xf]
    %22 = vset.pattern.permute.xlu0 2
    %23 = vperm.xlu0 %22, %v18
    %v24 = vpop.permute.xlu0 %23
    %27 = vset.pattern.permute.xlu0 2
    %28 = vperm.xlu0 %27, %v19
    %v29 = vpop.permute.xlu0 %28
    %v31 = vlaneseq
    %v32 = vshrl.u32 %v31, 7
    %v33 = vsub.s32 2, %v32
    %v34 = vrot.slane %v20, %v33
    %v35 = vmin.f32 %v24, %v34
    %v36 = vmin.f32 %v29, %v34
    %37 = vset.pattern.permute.xlu0 0
    %38 = vperm.xlu0 %37, %v18
    %v39 = vpop.permute.xlu0 %38
    %41 = vset.pattern.permute.xlu0 0
    %42 = vperm.xlu0 %41, %v19
    %v43 = vpop.permute.xlu0 %42
    %v45 = vlaneseq
    %v46 = vshrl.u32 %v45, 7
    %v47 = vsub.s32 0, %v46
    %v48 = vrot.slane %v20, %v47
    %v49 = vmax.f32 %v39, %v48
    %v50 = vmax.f32 %v43, %v48
    %v51 = vsub.f32 %v35, %v49
    %v52 = vsub.f32 %v36, %v50
    %v53 = vmax.f32 %v51, 0.0
    %v54 = vmax.f32 %v52, 0.0
    %55 = vset.pattern.permute.xlu0 3
    %56 = vperm.xlu0 %55, %v18
    %v57 = vpop.permute.xlu0 %56
    %59 = vset.pattern.permute.xlu0 3
    %60 = vperm.xlu0 %59, %v19
    %v61 = vpop.permute.xlu0 %60
    %v63 = vlaneseq
    %v64 = vshrl.u32 %v63, 7
    %v65 = vsub.s32 3, %v64
    %v66 = vrot.slane %v20, %v65
    %v67 = vmin.f32 %v57, %v66
    %v68 = vmin.f32 %v61, %v66
    %69 = vset.pattern.permute.xlu0 1
    %70 = vperm.xlu0 %69, %v18
    %v71 = vpop.permute.xlu0 %70
    %73 = vset.pattern.permute.xlu0 1
    %74 = vperm.xlu0 %73, %v19
    %v75 = vpop.permute.xlu0 %74
    %v77 = vlaneseq
    %v78 = vshrl.u32 %v77, 7
    %v79 = vsub.s32 1, %v78
    %v80 = vrot.slane %v20, %v79
    %v81 = vmax.f32 %v71, %v80
    %v82 = vmax.f32 %v75, %v80
    %v83 = vsub.f32 %v67, %v81
    %v84 = vsub.f32 %v68, %v82
    %v85 = vmax.f32 %v83, 0.0
    %v86 = vmax.f32 %v84, 0.0
    %v87 = vmul.f32 %v53, %v85
    %v88 = vmul.f32 %v54, %v86
    %v89 = vld [vmem:[%s1] sm:$0xff]
    %v90 = vld [vmem:[%s1 + $0x8] sm:$0xff]
    %v91 = vld [vmem:[%s3] sm:$0x1]
    %93 = vset.pattern.permute.xlu0 0
    %94 = vperm.xlu0 %93, %v89
    %v95 = vpop.permute.xlu0 %94
    %98 = vset.pattern.permute.xlu0 0
    %99 = vperm.xlu0 %98, %v90
    %v100 = vpop.permute.xlu0 %99
    %v103 = vlaneseq
    %v104 = vshrl.u32 %v103, 7
    %v105 = vsub.s32 0, %v104
    %v106 = vrot.slane %v91, %v105
    %v108 = vadd.f32 %v95, %v106
    %v109 = vadd.f32 %v100, %v106
    %v110 = vsub.f32 %v108, %v87
    %v111 = vsub.f32 %v109, %v88
    %v112 = vmax.f32 %v110, 1e-06
    %v113 = vmax.f32 %v111, 1e-06
    %v114 = vrcp.pop %v112
    %v115 = vrcp.pop %v113
    %v116 = vmul.f32 %v87, %v114
    %v117 = vmul.f32 %v88, %v115
    %118 = vst [vmem:[#allocation2] sm:$0xff] %v116
    %119 = vst [vmem:[#allocation2 + $0x8] sm:$0xff] %v117
    // Predicated region
    $region18: #{_iou_padded.1} parent=1 // pred_check
      _
    $region19: #{_iou_padded.1} parent=1 // pred_check_branch
      %121 = sbr.rel (0) target = $region21
    $region20: #{_iou_padded.1} parent=1 // pred_region
      %s123 = ssub.s32 256, 256
      %124 = vsyncadd [#allocation3], %s123
      %s125 = sshll.u32 [#allocation2], 4
      %s126 = int_to_ptr.vmem [resolvable:$true] %s125
      %131 = dma.vmem_to_hbm [thread:$0]  %s126, 256, %s4, [#allocation3], 128, 128, 8
    $region21: #{_iou_padded.1} parent=1 // pred_fallthru
      _
    // Predicated region
    $region22: #{_iou_padded.1} parent=1 // pred_check
      _
    $region23: #{_iou_padded.1} parent=1 // pred_check_branch
      %133 = sbr.rel (0) target = $region25
    $region24: #{_iou_padded.1} parent=1 // pred_region
      %134 = dma.done [#allocation3], 256
    $region25: #{_iou_padded.1} parent=1 // pred_fallthru
      _
    %135 = vsyncpa [#allocation3], 1

</llo_original>
